<compile_context>
chip_gen: v5e
topology: v5e:2x2
jax: 0.10.0
libtpu: 0.0.40
codegen_flags: <defaults>
</compile_context>

<pallas_src>
import jax
import jax.numpy as jnp
from jax.experimental import pallas as pl
from jax.experimental.pallas import tpu as pltpu


def logreg_kernel(x_ref, w_ref, b_ref, o_ref):
    # x_ref: (Bt, F)  batch on sublanes, features on lanes (native layout)
    # w_ref: (1, F)   weight row, broadcast over sublanes
    # b_ref: (1, 1)   scalar bias
    # o_ref: (Bt, 1)  per-row probability
    prod = x_ref[...] * w_ref[...]                   # VPU elementwise (broadcast)
    z = jnp.sum(prod, axis=-1, keepdims=True)        # XLU lane reduce -> (Bt, 1)
    z = z + b_ref[...]                               # bias

    # Numerically stable exact sigmoid: exp of a non-positive argument only.
    ez = jnp.exp(-jnp.abs(z))                        # EUP exp
    denom = 1.0 + ez
    y = jnp.where(z >= 0, 1.0 / denom, ez / denom)   # sigmoid(z), exact
    o_ref[...] = y.astype(o_ref.dtype)


def _pick_batch_tile(B, F, *, target_block_bytes=4 << 20, max_block_bytes=12 << 20):
    """Batch tile (multiple of 8) so each x block is a few MiB (HBM-roofline
    regime) while the double-buffered input stays well under v7x's 64 MiB VMEM.
    Prefers >= 2 tiles so the 'parallel' grid axis gives both TensorCores work."""
    bytes_per_row = max(F, 1) * 4
    by_budget = max(8, (max_block_bytes // bytes_per_row) // 8 * 8)
    by_target = max(8, (target_block_bytes // bytes_per_row) // 8 * 8)
    tile = min(by_budget, by_target)

    b_ceil8 = -(-B // 8) * 8                         # batch rounded up to sublane
    tile = min(tile, b_ceil8)
    if b_ceil8 >= 16 and tile > b_ceil8 // 2:        # keep >= 2 tiles (megacore)
        tile = max(8, (b_ceil8 // 2) // 8 * 8)
    return tile


def binary_logistic_regression(x, w, b):
    """Forward of BinaryLogisticRegressionModel.

    x: [B, F] float32
    w: [O, F] float32 (torch.nn.Linear weight layout), O must be 1
    b: [O]    float32
    returns [B, O] float32  ==  torch.sigmoid(x @ w.T + b)
    """
    B, F = x.shape
    O = w.shape[0]
    assert O == 1, "binary logistic regression: single output head"

    x = x.astype(jnp.float32)
    w_row = w.reshape(1, F).astype(jnp.float32)      # (1, F) broadcast row
    b2 = b.reshape(1, 1).astype(jnp.float32)         # (1, 1) scalar bias

    b_tile = _pick_batch_tile(B, F)
    n_tiles = pl.cdiv(B, b_tile)
    B_pad = n_tiles * b_tile
    if B_pad != B:
        x = jnp.pad(x, ((0, B_pad - B), (0, 0)))     # padded rows are sliced off

    cost = pl.CostEstimate(
        flops=2 * B_pad * F,
        transcendentals=B_pad,
        bytes_accessed=B_pad * F * 4 + B_pad * 4 + F * 4,
    )

    out = pl.pallas_call(
        logreg_kernel,
        out_shape=jax.ShapeDtypeStruct((B_pad, 1), jnp.float32),
        grid_spec=pltpu.PrefetchScalarGridSpec(
            num_scalar_prefetch=0,
            grid=(n_tiles,),
            in_specs=[
                pl.BlockSpec((b_tile, F), lambda i: (i, 0)),   # native-layout x tile
                pl.BlockSpec((1, F), lambda i: (0, 0)),        # weight row (resident)
                pl.BlockSpec((1, 1), lambda i: (0, 0)),        # bias scalar (resident)
            ],
            out_specs=pl.BlockSpec((b_tile, 1), lambda i: (i, 0)),
        ),
        compiler_params=pltpu.CompilerParams(
            dimension_semantics=("parallel",),                 # batch tiles independent
            vmem_limit_bytes=48 * 1024 * 1024,                 # fits v5e/v6e/v7x budgets
        ),
        cost_estimate=cost,
    )(x, w_row, b2)

    return out[:B, :]                                          # [B, O]


if __name__ == "__main__":
    # Small shapes consistent with the module; 2 tiles exercise the grid and the
    # 'parallel' batch axis.
    B, F, O = 512, 32, 1

    key = jax.random.PRNGKey(0)
    kx, kw, kb = jax.random.split(key, 3)

    # Parameter init mimicking torch.nn.Linear's U(-1/sqrt(F), 1/sqrt(F)).
    bound = 1.0 / jnp.sqrt(jnp.float32(F))
    x = jax.random.normal(kx, (B, F), dtype=jnp.float32)
    w = jax.random.uniform(kw, (O, F), dtype=jnp.float32, minval=-bound, maxval=bound)
    b = jax.random.uniform(kb, (O,), dtype=jnp.float32, minval=-bound, maxval=bound)

    y = binary_logistic_regression(x, w, b)
    y = jax.block_until_ready(y)

    # Reference check in plain JAX (same math as torch.sigmoid(Linear(x))).
    y_ref = jax.nn.sigmoid(x @ jnp.transpose(w) + b.reshape(1, O))
    assert y.shape == (B, O)
    assert jnp.allclose(y, y_ref, atol=1e-5, rtol=1e-5)

    print("KERNEL_OK")
</pallas_src>

<mosaic_0001>
module attributes {stable_mosaic.version = 11 : i64} {
  func.func @logreg_kernel(%arg0: i32, %arg1: memref<256x32xf32, #tpu.memory_space<vmem>>, %arg2: memref<1x32xf32, #tpu.memory_space<vmem>>, %arg3: memref<1x1xf32, #tpu.memory_space<vmem>>, %arg4: memref<256x1xf32, #tpu.memory_space<vmem>>) attributes {dimension_semantics = [#tpu.dimension_semantics<parallel>], iteration_bounds = array<i64: 2>, scalar_prefetch = 0 : i64, scratch_operands = 0 : i64, tpu.core_type = #tpu.core_type<tc>, window_params = [{transform_indices = @transform_0, window_bounds = array<i64: 256, 32>}, {pipeline_mode = #tpu.pipeline_mode<synchronous>, transform_indices = @transform_1, window_bounds = array<i64: 1, 32>}, {pipeline_mode = #tpu.pipeline_mode<synchronous>, transform_indices = @transform_2, window_bounds = array<i64: 1, 1>}, {transform_indices = @transform_3, window_bounds = array<i64: 256, 1>}]} {
    %c0 = arith.constant 0 : index
    %c0_0 = arith.constant 0 : index
    %0 = vector.load %arg1[%c0, %c0_0] : memref<256x32xf32, #tpu.memory_space<vmem>>, vector<256x32xf32>
    %c0_1 = arith.constant 0 : index
    %c0_2 = arith.constant 0 : index
    %1 = vector.load %arg2[%c0_1, %c0_2] : memref<1x32xf32, #tpu.memory_space<vmem>>, vector<1x32xf32>
    %2 = vector.broadcast %1 : vector<1x32xf32> to vector<256x32xf32>
    %3 = arith.mulf %0, %2 : vector<256x32xf32>
    %cst = arith.constant dense<0.000000e+00> : vector<256xf32>
    %4 = vector.multi_reduction <add>, %3, %cst [1] : vector<256x32xf32> to vector<256xf32>
    %5 = vector.shape_cast %4 : vector<256xf32> to vector<256x1xf32>
    %c0_3 = arith.constant 0 : index
    %c0_4 = arith.constant 0 : index
    %6 = vector.load %arg3[%c0_3, %c0_4] : memref<1x1xf32, #tpu.memory_space<vmem>>, vector<1x1xf32>
    %7 = vector.broadcast %6 : vector<1x1xf32> to vector<256x1xf32>
    %8 = arith.addf %5, %7 : vector<256x1xf32>
    %9 = math.absf %8 : vector<256x1xf32>
    %cst_5 = arith.constant 0.000000e+00 : f32
    %10 = vector.broadcast %cst_5 : f32 to vector<256x1xf32>
    %11 = arith.subf %10, %9 : vector<256x1xf32>
    %12 = math.exp %11 : vector<256x1xf32>
    %cst_6 = arith.constant 1.000000e+00 : f32
    %13 = vector.broadcast %cst_6 : f32 to vector<256x1xf32>
    %14 = arith.addf %13, %12 : vector<256x1xf32>
    %cst_7 = arith.constant 0.000000e+00 : f32
    %15 = vector.broadcast %cst_7 : f32 to vector<256x1xf32>
    %16 = arith.cmpf oge, %8, %15 : vector<256x1xf32>
    %cst_8 = arith.constant 1.000000e+00 : f32
    %17 = vector.broadcast %cst_8 : f32 to vector<256x1xf32>
    %18 = arith.divf %17, %14 : vector<256x1xf32>
    %19 = arith.divf %12, %14 : vector<256x1xf32>
    %20 = arith.select %16, %18, %19 : vector<256x1xi1>, vector<256x1xf32>
    %c0_9 = arith.constant 0 : index
    %c0_10 = arith.constant 0 : index
    %21 = vector.load %arg4[%c0_9, %c0_10] : memref<256x1xf32, #tpu.memory_space<vmem>>, vector<256x1xf32>
    tpu.vector_store %arg4[%c0_9, %c0_10], %20 {strides = array<i32>} : memref<256x1xf32, #tpu.memory_space<vmem>>, vector<256x1xf32>,
    return
  }
  func.func @transform_0(%arg0: i32) -> (i32, i32) {
    %c0_i32 = arith.constant 0 : i32
    %c0_i32_0 = arith.constant 0 : i32
    return %arg0, %c0_i32 : i32, i32
  }
  func.func @transform_1(%arg0: i32) -> (i32, i32) {
    %c0_i32 = arith.constant 0 : i32
    %c0_i32_0 = arith.constant 0 : i32
    %c0_i32_1 = arith.constant 0 : i32
    return %c0_i32, %c0_i32_0 : i32, i32
  }
  func.func @transform_2(%arg0: i32) -> (i32, i32) {
    %c0_i32 = arith.constant 0 : i32
    %c0_i32_0 = arith.constant 0 : i32
    %c0_i32_1 = arith.constant 0 : i32
    return %c0_i32, %c0_i32_0 : i32, i32
  }
  func.func @transform_3(%arg0: i32) -> (i32, i32) {
    %c0_i32 = arith.constant 0 : i32
    %c0_i32_0 = arith.constant 0 : i32
    return %arg0, %c0_i32 : i32, i32
  }
}

</mosaic_0001>

<llo_original>
// kernel: tpu_custom_call.1
$region0: #{tpu_custom_call.1}
  #allocation0 [shape = 'u32[]', space=smem, size = 0x4, offset = 0x4, fixed_abs, tag = 'smem constant byte address 0x4 - core index']
  #allocation1 [shape = 'u32[72,128]{1,0:T(1,128)}', space=vmem, size = 0x9000, scoped, tag = 'internal scratch']
  #allocation2 [shape = 'f32[1,1]{1,0:T(1,128)S(1)}', space=vmem, size = 0x200, scoped, tag = 'scoped memory for tpu_custom_call.1']
  %s0 = inlined_call_operand.vmem [shape: f32[512,32], index: 0, kind: input, shape index: {}]
  %s1 = inlined_call_operand.vmem [shape: f32[1,32], index: 1, kind: input, shape index: {}]
  %s2 = inlined_call_operand.<no memory space> [shape: f32[1,1], index: 2, kind: input, shape index: {}]
  %s3 = inlined_call_operand.vmem [shape: f32[512,1], index: 3, kind: output, shape index: {}]
  %s4 = sld [smem:[#allocation0]]
  $region45: #{tpu_custom_call.1} parent=0
    _
  %s6 = ssub.s32 1, %s4
  %s7 = scalar_select 0, %s6, %s4
  %v8 = vstv %s2
  %9 = vst [vmem:[#allocation2] sm:$0x1] %v8
  loop: start=0, step=1, limit=4
  $region2: #{tpu_custom_call.1} parent=0 // loop_pre_header
    _
  $region3: #{tpu_custom_call.1} parent=0 // loop_header
    %s11 = sphi 0, %s15
    %p12 = scmp.ge.s32.totalorder %s11, 4
    %s21 = sphi 0, %s23
    %s24 = sphi 0, %s21
    %s25 = sphi 0, %s24
    %s41 = sphi 0, %s25
    %s45 = sphi 0, %s45
    %s47 = sphi 0, %s45
    %s48 = sphi 0, %s47
    %s62 = sphi 0, %s48
    %s66 = sphi 0, %s66
    %s68 = sphi 0, %s66
    %s69 = sphi 0, %s68
    %s83 = sphi 0, %s69
    %s89 = sphi 0, %s91
    %s92 = sphi 0, %s89
    %s93 = sphi 0, %s92
    %s109 = sphi 0, %s93
  $region4: #{tpu_custom_call.1} parent=0 // loop_header_branch
    %14 = sbr.rel (%p12) target = $region8
  $region5: #{tpu_custom_call.1} parent=0 // loop_body
    %s16 = ssub.s32 %s11, 1
    %s17 = ssub.s32 %s11, 2
    %s18 = sadd.s32 %s11, 1
    %s19 = ssub.s32 %s11, %s18
    %p20 = scmp.eq.s32.totalorder %s19, 0
    %s22 = sadd.s32 %s21, 1
    %s23 = scalar_select %p20, %s21, %s22
    %p26 = pneg %p20
    %p27 = scmp.eq.s32.totalorder %s11, 1
    %p28 = por %p26, %p27
    %p29 = scmp.ne.s32.totalorder %s21, %s24
    %p30 = scmp.eq.s32.totalorder %s11, 0
    %p31 = por %p29, %p30
    %p32 = scmp.ne.s32.totalorder %s21, %s24
    %p33 = scmp.eq.s32.totalorder %s16, 1
    %p34 = por %p32, %p33
    %p35 = scmp.ne.s32.totalorder %s24, %s25
    %p36 = scmp.eq.s32.totalorder %s16, 0
    %p37 = por %p35, %p36
    %p38 = scmp.ne.s32.totalorder %s24, %s25
    %p39 = scmp.eq.s32.totalorder %s17, 1
    %p40 = por %p38, %p39
    %p42 = scmp.ne.s32.totalorder %s25, %s41
    %p43 = scmp.eq.s32.totalorder %s17, 0
    %p44 = por %p42, %p43
    %s46 = sadd.s32 %s45, 1
    %p49 = scmp.eq.s32.totalorder %s11, 1
    %p50 = scmp.ne.s32.totalorder %s45, %s47
    %p51 = scmp.eq.s32.totalorder %s11, 0
    %p52 = por %p50, %p51
    %p53 = scmp.ne.s32.totalorder %s45, %s47
    %p54 = scmp.eq.s32.totalorder %s16, 1
    %p55 = por %p53, %p54
    %p56 = scmp.ne.s32.totalorder %s47, %s48
    %p57 = scmp.eq.s32.totalorder %s16, 0
    %p58 = por %p56, %p57
    %p59 = scmp.ne.s32.totalorder %s47, %s48
    %p60 = scmp.eq.s32.totalorder %s17, 1
    %p61 = por %p59, %p60
    %p63 = scmp.ne.s32.totalorder %s48, %s62
    %p64 = scmp.eq.s32.totalorder %s17, 0
    %p65 = por %p63, %p64
    %s67 = sadd.s32 %s66, 1
    %p70 = scmp.eq.s32.totalorder %s11, 1
    %p71 = scmp.ne.s32.totalorder %s66, %s68
    %p72 = scmp.eq.s32.totalorder %s11, 0
    %p73 = por %p71, %p72
    %p74 = scmp.ne.s32.totalorder %s66, %s68
    %p75 = scmp.eq.s32.totalorder %s16, 1
    %p76 = por %p74, %p75
    %p77 = scmp.ne.s32.totalorder %s68, %s69
    %p78 = scmp.eq.s32.totalorder %s16, 0
    %p79 = por %p77, %p78
    %p80 = scmp.ne.s32.totalorder %s68, %s69
    %p81 = scmp.eq.s32.totalorder %s17, 1
    %p82 = por %p80, %p81
    %p84 = scmp.ne.s32.totalorder %s69, %s83
    %p85 = scmp.eq.s32.totalorder %s17, 0
    %p86 = por %p84, %p85
    %s87 = ssub.s32 %s11, %s18
    %p88 = scmp.eq.s32.totalorder %s87, 0
    %s90 = sadd.s32 %s89, 1
    %s91 = scalar_select %p88, %s89, %s90
    %p94 = pneg %p88
    %p95 = scmp.eq.s32.totalorder %s11, 1
    %p96 = por %p94, %p95
    %p97 = scmp.ne.s32.totalorder %s89, %s92
    %p98 = scmp.eq.s32.totalorder %s11, 0
    %p99 = por %p97, %p98
    %p100 = scmp.ne.s32.totalorder %s89, %s92
    %p101 = scmp.eq.s32.totalorder %s16, 1
    %p102 = por %p100, %p101
    %p103 = scmp.ne.s32.totalorder %s92, %s93
    %p104 = scmp.eq.s32.totalorder %s16, 0
    %p105 = por %p103, %p104
    %p106 = scmp.ne.s32.totalorder %s92, %s93
    %p107 = scmp.eq.s32.totalorder %s17, 1
    %p108 = por %p106, %p107
    %p110 = scmp.ne.s32.totalorder %s93, %s109
    %p111 = scmp.eq.s32.totalorder %s17, 0
    %p112 = por %p110, %p111
    %p113 = scmp.le.s32.totalorder 1, %s11
    %p114 = scmp.lt.s32.totalorder %s11, 3
    %p115 = pnand %p113, %p114
    %p116 = pneg %p115
    // Predicated region
    $region9: #{tpu_custom_call.1} parent=5 // pred_check
      _
    $region10: #{tpu_custom_call.1} parent=5 // pred_check_branch
      %118 = sbr.rel (%p115) target = $region12
    $region11: #{tpu_custom_call.1} parent=5 // pred_region
      %s119 = ssub.s32 %s11, 1
      // Predicated region
      $region13: #{tpu_custom_call.1} parent=11 // pred_check
        %p120 = pneg %p58
      $region14: #{tpu_custom_call.1} parent=11 // pred_check_branch
        %122 = sbr.rel (%p120) target = $region16
      $region15: #{tpu_custom_call.1} parent=11 // pred_region
        _
      $region16: #{tpu_custom_call.1} parent=11 // pred_fallthru
        _
      // Predicated region
      $region17: #{tpu_custom_call.1} parent=11 // pred_check
        %p123 = pneg %p79
      $region18: #{tpu_custom_call.1} parent=11 // pred_check_branch
        %125 = sbr.rel (%p123) target = $region20
      $region19: #{tpu_custom_call.1} parent=11 // pred_region
        _
      $region20: #{tpu_custom_call.1} parent=11 // pred_fallthru
        _
    $region12: #{tpu_custom_call.1} parent=5 // pred_fallthru
      _
    %p126 = scmp.lt.s32.totalorder %s11, 2
    // Predicated region
    $region21: #{tpu_custom_call.1} parent=5 // pred_check
      %p127 = pneg %p126
    $region22: #{tpu_custom_call.1} parent=5 // pred_check_branch
      %129 = sbr.rel (%p127) target = $region24
    $region23: #{tpu_custom_call.1} parent=5 // pred_region
      // Predicated region
      $region25: #{tpu_custom_call.1} parent=23 // pred_check
        %p130 = pneg %p31
      $region26: #{tpu_custom_call.1} parent=23 // pred_check_branch
        %132 = sbr.rel (%p130) target = $region28
      $region27: #{tpu_custom_call.1} parent=23 // pred_region
        %s133 = smul.u32 32, %s11
        %p134 = scmp.lt.s32.totalorder %s133, 63
        %s135 = scalar_select %p134, %s133, 63
        %s136 = smul.addr %s135, 8
        %s137 = scalar_lea.vmem %s0, %s136
        %s138 = smul.u32 32, %s11
      $region28: #{tpu_custom_call.1} parent=23 // pred_fallthru
        _
    $region24: #{tpu_custom_call.1} parent=5 // pred_fallthru
      _
    %p139 = scmp.le.s32.totalorder 1, %s11
    %p140 = scmp.lt.s32.totalorder %s11, 3
    %p141 = pnand %p139, %p140
    %p142 = pneg %p141
    // Predicated region
    $region29: #{tpu_custom_call.1} parent=5 // pred_check
      _
    $region30: #{tpu_custom_call.1} parent=5 // pred_check_branch
      %144 = sbr.rel (%p141) target = $region32
    $region31: #{tpu_custom_call.1} parent=5 // pred_region
      %s145 = ssub.s32 %s11, 1
      %s146 = smul.u32 32, %s16
      %p147 = scmp.lt.s32.totalorder %s146, 63
      %s148 = scalar_select %p147, %s146, 63
      %s149 = smul.addr %s148, 8
      %s150 = scalar_lea.vmem %s0, %s149
      %p151 = pneg %p37
      %p152 = pneg %p34
      %p153 = pneg %p58
      %p154 = pneg %p55
      %p155 = pneg %p79
      %p156 = pneg %p76
      %p157 = pneg %p105
      %p158 = pneg %p102
      %s159 = smul.u32 32, %s16
      %p160 = scmp.lt.s32.totalorder %s159, 63
      %s161 = scalar_select %p160, %s159, 63
      %s162 = smul.addr %s161, 8
      %s163 = scalar_lea.vmem %s3, %s162
      %s164 = smul.u32 32, %s16
      %p165 = scmp.lt.s32.totalorder %s164, 63
      %s166 = scalar_select %p165, %s164, 63
      %s167 = smul.addr %s166, 8
      %s168 = scalar_lea.vmem %s0, %s167
      %s169 = smul.u32 32, %s16
      %s170 = smul.u32 32, %s16
      %p171 = scmp.lt.s32.totalorder %s170, 63
      %s172 = scalar_select %p171, %s170, 63
      %s173 = smul.addr %s172, 8
      %s174 = scalar_lea.vmem %s3, %s173
      %s175 = smul.u32 32, %s16
      %v176 = vld [vmem:[%s168] sm:$0xff]
      %v177 = vld [vmem:[%s168 + $0x8] sm:$0xff]
      %v178 = vld [vmem:[%s168 + $0x10] sm:$0xff]
      %v179 = vld [vmem:[%s168 + $0x18] sm:$0xff]
      %v180 = vld [vmem:[%s168 + $0x20] sm:$0xff]
      %v181 = vld [vmem:[%s168 + $0x28] sm:$0xff]
      %v182 = vld [vmem:[%s168 + $0x30] sm:$0xff]
      %v183 = vld [vmem:[%s168 + $0x38] sm:$0xff]
      %v184 = vld [vmem:[%s168 + $0x40] sm:$0xff]
      %v185 = vld [vmem:[%s168 + $0x48] sm:$0xff]
      %v186 = vld [vmem:[%s168 + $0x50] sm:$0xff]
      %v187 = vld [vmem:[%s168 + $0x58] sm:$0xff]
      %v188 = vld [vmem:[%s168 + $0x60] sm:$0xff]
      %v189 = vld [vmem:[%s168 + $0x68] sm:$0xff]
      %v190 = vld [vmem:[%s168 + $0x70] sm:$0xff]
      %v191 = vld [vmem:[%s168 + $0x78] sm:$0xff]
      %v192 = vld [vmem:[%s168 + $0x80] sm:$0xff]
      %v193 = vld [vmem:[%s168 + $0x88] sm:$0xff]
      %v194 = vld [vmem:[%s168 + $0x90] sm:$0xff]
      %v195 = vld [vmem:[%s168 + $0x98] sm:$0xff]
      %v196 = vld [vmem:[%s168 + $0xa0] sm:$0xff]
      %v197 = vld [vmem:[%s168 + $0xa8] sm:$0xff]
      %v198 = vld [vmem:[%s168 + $0xb0] sm:$0xff]
      %v199 = vld [vmem:[%s168 + $0xb8] sm:$0xff]
      %v200 = vld [vmem:[%s168 + $0xc0] sm:$0xff]
      %v201 = vld [vmem:[%s168 + $0xc8] sm:$0xff]
      %v202 = vld [vmem:[%s168 + $0xd0] sm:$0xff]
      %v203 = vld [vmem:[%s168 + $0xd8] sm:$0xff]
      %v204 = vld [vmem:[%s168 + $0xe0] sm:$0xff]
      %v205 = vld [vmem:[%s168 + $0xe8] sm:$0xff]
      %v206 = vld [vmem:[%s168 + $0xf0] sm:$0xff]
      %v207 = vld [vmem:[%s168 + $0xf8] sm:$0xff]
      %v208 = vld [vmem:[%s1] sm:$0x1]
      %v210 = vperm.slane %v208, 0
      %v212 = vmul.f32 %v176, %v210
      %v213 = vmul.f32 %v177, %v210
      %v214 = vmul.f32 %v178, %v210
      %v215 = vmul.f32 %v179, %v210
      %v216 = vmul.f32 %v180, %v210
      %v217 = vmul.f32 %v181, %v210
      %v218 = vmul.f32 %v182, %v210
      %v219 = vmul.f32 %v183, %v210
      %v220 = vmul.f32 %v184, %v210
      %v221 = vmul.f32 %v185, %v210
      %v222 = vmul.f32 %v186, %v210
      %v223 = vmul.f32 %v187, %v210
      %v224 = vmul.f32 %v188, %v210
      %v225 = vmul.f32 %v189, %v210
      %v226 = vmul.f32 %v190, %v210
      %v227 = vmul.f32 %v191, %v210
      %v228 = vmul.f32 %v192, %v210
      %v229 = vmul.f32 %v193, %v210
      %v230 = vmul.f32 %v194, %v210
      %v231 = vmul.f32 %v195, %v210
      %v232 = vmul.f32 %v196, %v210
      %v233 = vmul.f32 %v197, %v210
      %v234 = vmul.f32 %v198, %v210
      %v235 = vmul.f32 %v199, %v210
      %v236 = vmul.f32 %v200, %v210
      %v237 = vmul.f32 %v201, %v210
      %v238 = vmul.f32 %v202, %v210
      %v239 = vmul.f32 %v203, %v210
      %v240 = vmul.f32 %v204, %v210
      %v241 = vmul.f32 %v205, %v210
      %v242 = vmul.f32 %v206, %v210
      %v243 = vmul.f32 %v207, %v210
      %vm244 = vcmask 261120
      %v245 = vsel %vm244, %v212, 0.0
      %246 = vadd.xlane.f32.xlu0 %v245
      %v247 = vpop.xlane.xlu0 %246
      %v248 = vsel %vm244, %v213, 0.0
      %249 = vadd.xlane.f32.xlu0 %v248
      %v250 = vpop.xlane.xlu0 %249
      %v251 = vsel %vm244, %v214, 0.0
      %252 = vadd.xlane.f32.xlu0 %v251
      %v253 = vpop.xlane.xlu0 %252
      %v254 = vsel %vm244, %v215, 0.0
      %255 = vadd.xlane.f32.xlu0 %v254
      %v256 = vpop.xlane.xlu0 %255
      %v257 = vsel %vm244, %v216, 0.0
      %258 = vadd.xlane.f32.xlu0 %v257
      %v259 = vpop.xlane.xlu0 %258
      %v260 = vsel %vm244, %v217, 0.0
      %261 = vadd.xlane.f32.xlu0 %v260
      %v262 = vpop.xlane.xlu0 %261
      %v263 = vsel %vm244, %v218, 0.0
      %264 = vadd.xlane.f32.xlu0 %v263
      %v265 = vpop.xlane.xlu0 %264
      %v266 = vsel %vm244, %v219, 0.0
      %267 = vadd.xlane.f32.xlu0 %v266
      %v268 = vpop.xlane.xlu0 %267
      %v269 = vsel %vm244, %v220, 0.0
      %270 = vadd.xlane.f32.xlu0 %v269
      %v271 = vpop.xlane.xlu0 %270
      %v272 = vsel %vm244, %v221, 0.0
      %273 = vadd.xlane.f32.xlu0 %v272
      %v274 = vpop.xlane.xlu0 %273
      %v275 = vsel %vm244, %v222, 0.0
      %276 = vadd.xlane.f32.xlu0 %v275
      %v277 = vpop.xlane.xlu0 %276
      %v278 = vsel %vm244, %v223, 0.0
      %279 = vadd.xlane.f32.xlu0 %v278
      %v280 = vpop.xlane.xlu0 %279
      %v281 = vsel %vm244, %v224, 0.0
      %282 = vadd.xlane.f32.xlu0 %v281
      %v283 = vpop.xlane.xlu0 %282
      %v284 = vsel %vm244, %v225, 0.0
      %285 = vadd.xlane.f32.xlu0 %v284
      %v286 = vpop.xlane.xlu0 %285
      %v287 = vsel %vm244, %v226, 0.0
      %288 = vadd.xlane.f32.xlu0 %v287
      %v289 = vpop.xlane.xlu0 %288
      %v290 = vsel %vm244, %v227, 0.0
      %291 = vadd.xlane.f32.xlu0 %v290
      %v292 = vpop.xlane.xlu0 %291
      %v293 = vsel %vm244, %v228, 0.0
      %294 = vadd.xlane.f32.xlu0 %v293
      %v295 = vpop.xlane.xlu0 %294
      %v296 = vsel %vm244, %v229, 0.0
      %297 = vadd.xlane.f32.xlu0 %v296
      %v298 = vpop.xlane.xlu0 %297
      %v299 = vsel %vm244, %v230, 0.0
      %300 = vadd.xlane.f32.xlu0 %v299
      %v301 = vpop.xlane.xlu0 %300
      %v302 = vsel %vm244, %v231, 0.0
      %303 = vadd.xlane.f32.xlu0 %v302
      %v304 = vpop.xlane.xlu0 %303
      %v305 = vsel %vm244, %v232, 0.0
      %306 = vadd.xlane.f32.xlu0 %v305
      %v307 = vpop.xlane.xlu0 %306
      %v308 = vsel %vm244, %v233, 0.0
      %309 = vadd.xlane.f32.xlu0 %v308
      %v310 = vpop.xlane.xlu0 %309
      %v311 = vsel %vm244, %v234, 0.0
      %312 = vadd.xlane.f32.xlu0 %v311
      %v313 = vpop.xlane.xlu0 %312
      %v314 = vsel %vm244, %v235, 0.0
      %315 = vadd.xlane.f32.xlu0 %v314
      %v316 = vpop.xlane.xlu0 %315
      %v317 = vsel %vm244, %v236, 0.0
      %318 = vadd.xlane.f32.xlu0 %v317
      %v319 = vpop.xlane.xlu0 %318
      %v320 = vsel %vm244, %v237, 0.0
      %321 = vadd.xlane.f32.xlu0 %v320
      %v322 = vpop.xlane.xlu0 %321
      %v323 = vsel %vm244, %v238, 0.0
      %324 = vadd.xlane.f32.xlu0 %v323
      %v325 = vpop.xlane.xlu0 %324
      %v326 = vsel %vm244, %v239, 0.0
      %327 = vadd.xlane.f32.xlu0 %v326
      %v328 = vpop.xlane.xlu0 %327
      %v329 = vsel %vm244, %v240, 0.0
      %330 = vadd.xlane.f32.xlu0 %v329
      %v331 = vpop.xlane.xlu0 %330
      %v332 = vsel %vm244, %v241, 0.0
      %333 = vadd.xlane.f32.xlu0 %v332
      %v334 = vpop.xlane.xlu0 %333
      %v335 = vsel %vm244, %v242, 0.0
      %336 = vadd.xlane.f32.xlu0 %v335
      %v337 = vpop.xlane.xlu0 %336
      %v338 = vsel %vm244, %v243, 0.0
      %339 = vadd.xlane.f32.xlu0 %v338
      %v340 = vpop.xlane.xlu0 %339
      %v341 = vld [vmem:[#allocation2] sm:$0x1]
      %v343 = vperm.slane %v341, 0
      %v345 = vadd.f32 %v247, %v343
      %v346 = vadd.f32 %v250, %v343
      %v347 = vadd.f32 %v253, %v343
      %v348 = vadd.f32 %v256, %v343
      %v349 = vadd.f32 %v259, %v343
      %v350 = vadd.f32 %v262, %v343
      %v351 = vadd.f32 %v265, %v343
      %v352 = vadd.f32 %v268, %v343
      %v353 = vadd.f32 %v271, %v343
      %v354 = vadd.f32 %v274, %v343
      %v355 = vadd.f32 %v277, %v343
      %v356 = vadd.f32 %v280, %v343
      %v357 = vadd.f32 %v283, %v343
      %v358 = vadd.f32 %v286, %v343
      %v359 = vadd.f32 %v289, %v343
      %v360 = vadd.f32 %v292, %v343
      %v361 = vadd.f32 %v295, %v343
      %v362 = vadd.f32 %v298, %v343
      %v363 = vadd.f32 %v301, %v343
      %v364 = vadd.f32 %v304, %v343
      %v365 = vadd.f32 %v307, %v343
      %v366 = vadd.f32 %v310, %v343
      %v367 = vadd.f32 %v313, %v343
      %v368 = vadd.f32 %v316, %v343
      %v369 = vadd.f32 %v319, %v343
      %v370 = vadd.f32 %v322, %v343
      %v371 = vadd.f32 %v325, %v343
      %v372 = vadd.f32 %v328, %v343
      %v373 = vadd.f32 %v331, %v343
      %v374 = vadd.f32 %v334, %v343
      %v375 = vadd.f32 %v337, %v343
      %v376 = vadd.f32 %v340, %v343
      %v377 = vand.u32 2147483647, %v345
      %v378 = vand.u32 2147483647, %v346
      %v379 = vand.u32 2147483647, %v347
      %v380 = vand.u32 2147483647, %v348
      %v381 = vand.u32 2147483647, %v349
      %v382 = vand.u32 2147483647, %v350
      %v383 = vand.u32 2147483647, %v351
      %v384 = vand.u32 2147483647, %v352
      %v385 = vand.u32 2147483647, %v353
      %v386 = vand.u32 2147483647, %v354
      %v387 = vand.u32 2147483647, %v355
      %v388 = vand.u32 2147483647, %v356
      %v389 = vand.u32 2147483647, %v357
      %v390 = vand.u32 2147483647, %v358
      %v391 = vand.u32 2147483647, %v359
      %v392 = vand.u32 2147483647, %v360
      %v393 = vand.u32 2147483647, %v361
      %v394 = vand.u32 2147483647, %v362
      %v395 = vand.u32 2147483647, %v363
      %v396 = vand.u32 2147483647, %v364
      %v397 = vand.u32 2147483647, %v365
      %v398 = vand.u32 2147483647, %v366
      %v399 = vand.u32 2147483647, %v367
      %v400 = vand.u32 2147483647, %v368
      %v401 = vand.u32 2147483647, %v369
      %v402 = vand.u32 2147483647, %v370
      %v403 = vand.u32 2147483647, %v371
      %v404 = vand.u32 2147483647, %v372
      %v405 = vand.u32 2147483647, %v373
      %v406 = vand.u32 2147483647, %v374
      %v407 = vand.u32 2147483647, %v375
      %v408 = vand.u32 2147483647, %v376
      %v409 = vsub.f32 0.0, %v377
      %v410 = vsub.f32 0.0, %v378
      %v411 = vsub.f32 0.0, %v379
      %v412 = vsub.f32 0.0, %v380
      %v413 = vsub.f32 0.0, %v381
      %v414 = vsub.f32 0.0, %v382
      %v415 = vsub.f32 0.0, %v383
      %v416 = vsub.f32 0.0, %v384
      %v417 = vsub.f32 0.0, %v385
      %v418 = vsub.f32 0.0, %v386
      %v419 = vsub.f32 0.0, %v387
      %v420 = vsub.f32 0.0, %v388
      %v421 = vsub.f32 0.0, %v389
      %v422 = vsub.f32 0.0, %v390
      %v423 = vsub.f32 0.0, %v391
      %v424 = vsub.f32 0.0, %v392
      %v425 = vsub.f32 0.0, %v393
      %v426 = vsub.f32 0.0, %v394
      %v427 = vsub.f32 0.0, %v395
      %v428 = vsub.f32 0.0, %v396
      %v429 = vsub.f32 0.0, %v397
      %v430 = vsub.f32 0.0, %v398
      %v431 = vsub.f32 0.0, %v399
      %v432 = vsub.f32 0.0, %v400
      %v433 = vsub.f32 0.0, %v401
      %v434 = vsub.f32 0.0, %v402
      %v435 = vsub.f32 0.0, %v403
      %v436 = vsub.f32 0.0, %v404
      %v437 = vsub.f32 0.0, %v405
      %v438 = vsub.f32 0.0, %v406
      %v439 = vsub.f32 0.0, %v407
      %v440 = vsub.f32 0.0, %v408
      %v441 = vmul.f32 %v409, 1.442695
      %v442 = vpow.pop %v441
      %v443 = vmul.f32 %v410, 1.442695
      %v444 = vpow.pop %v443
      %v445 = vmul.f32 %v411, 1.442695
      %v446 = vpow.pop %v445
      %v447 = vmul.f32 %v412, 1.442695
      %v448 = vpow.pop %v447
      %v449 = vmul.f32 %v413, 1.442695
      %v450 = vpow.pop %v449
      %v451 = vmul.f32 %v414, 1.442695
      %v452 = vpow.pop %v451
      %v453 = vmul.f32 %v415, 1.442695
      %v454 = vpow.pop %v453
      %v455 = vmul.f32 %v416, 1.442695
      %v456 = vpow.pop %v455
      %v457 = vmul.f32 %v417, 1.442695
      %v458 = vpow.pop %v457
      %v459 = vmul.f32 %v418, 1.442695
      %v460 = vpow.pop %v459
      %v461 = vmul.f32 %v419, 1.442695
      %v462 = vpow.pop %v461
      %v463 = vmul.f32 %v420, 1.442695
      %v464 = vpow.pop %v463
      %v465 = vmul.f32 %v421, 1.442695
      %v466 = vpow.pop %v465
      %v467 = vmul.f32 %v422, 1.442695
      %v468 = vpow.pop %v467
      %v469 = vmul.f32 %v423, 1.442695
      %v470 = vpow.pop %v469
      %v471 = vmul.f32 %v424, 1.442695
      %v472 = vpow.pop %v471
      %v473 = vmul.f32 %v425, 1.442695
      %v474 = vpow.pop %v473
      %v475 = vmul.f32 %v426, 1.442695
      %v476 = vpow.pop %v475
      %v477 = vmul.f32 %v427, 1.442695
      %v478 = vpow.pop %v477
      %v479 = vmul.f32 %v428, 1.442695
      %v480 = vpow.pop %v479
      %v481 = vmul.f32 %v429, 1.442695
      %v482 = vpow.pop %v481
      %v483 = vmul.f32 %v430, 1.442695
      %v484 = vpow.pop %v483
      %v485 = vmul.f32 %v431, 1.442695
      %v486 = vpow.pop %v485
      %v487 = vmul.f32 %v432, 1.442695
      %v488 = vpow.pop %v487
      %v489 = vmul.f32 %v433, 1.442695
      %v490 = vpow.pop %v489
      %v491 = vmul.f32 %v434, 1.442695
      %v492 = vpow.pop %v491
      %v493 = vmul.f32 %v435, 1.442695
      %v494 = vpow.pop %v493
      %v495 = vmul.f32 %v436, 1.442695
      %v496 = vpow.pop %v495
      %v497 = vmul.f32 %v437, 1.442695
      %v498 = vpow.pop %v497
      %v499 = vmul.f32 %v438, 1.442695
      %v500 = vpow.pop %v499
      %v501 = vmul.f32 %v439, 1.442695
      %v502 = vpow.pop %v501
      %v503 = vmul.f32 %v440, 1.442695
      %v504 = vpow.pop %v503
      %v505 = vadd.f32 %v442, 1.0
      %v506 = vadd.f32 %v444, 1.0
      %v507 = vadd.f32 %v446, 1.0
      %v508 = vadd.f32 %v448, 1.0
      %v509 = vadd.f32 %v450, 1.0
      %v510 = vadd.f32 %v452, 1.0
      %v511 = vadd.f32 %v454, 1.0
      %v512 = vadd.f32 %v456, 1.0
      %v513 = vadd.f32 %v458, 1.0
      %v514 = vadd.f32 %v460, 1.0
      %v515 = vadd.f32 %v462, 1.0
      %v516 = vadd.f32 %v464, 1.0
      %v517 = vadd.f32 %v466, 1.0
      %v518 = vadd.f32 %v468, 1.0
      %v519 = vadd.f32 %v470, 1.0
      %v520 = vadd.f32 %v472, 1.0
      %v521 = vadd.f32 %v474, 1.0
      %v522 = vadd.f32 %v476, 1.0
      %v523 = vadd.f32 %v478, 1.0
      %v524 = vadd.f32 %v480, 1.0
      %v525 = vadd.f32 %v482, 1.0
      %v526 = vadd.f32 %v484, 1.0
      %v527 = vadd.f32 %v486, 1.0
      %v528 = vadd.f32 %v488, 1.0
      %v529 = vadd.f32 %v490, 1.0
      %v530 = vadd.f32 %v492, 1.0
      %v531 = vadd.f32 %v494, 1.0
      %v532 = vadd.f32 %v496, 1.0
      %v533 = vadd.f32 %v498, 1.0
      %v534 = vadd.f32 %v500, 1.0
      %v535 = vadd.f32 %v502, 1.0
      %v536 = vadd.f32 %v504, 1.0
      %vm537 = vcmp.ge.f32.partialorder %v345, 0.0
      %vm538 = vcmp.ge.f32.partialorder %v346, 0.0
      %vm539 = vcmp.ge.f32.partialorder %v347, 0.0
      %vm540 = vcmp.ge.f32.partialorder %v348, 0.0
      %vm541 = vcmp.ge.f32.partialorder %v349, 0.0
      %vm542 = vcmp.ge.f32.partialorder %v350, 0.0
      %vm543 = vcmp.ge.f32.partialorder %v351, 0.0
      %vm544 = vcmp.ge.f32.partialorder %v352, 0.0
      %vm545 = vcmp.ge.f32.partialorder %v353, 0.0
      %vm546 = vcmp.ge.f32.partialorder %v354, 0.0
      %vm547 = vcmp.ge.f32.partialorder %v355, 0.0
      %vm548 = vcmp.ge.f32.partialorder %v356, 0.0
      %vm549 = vcmp.ge.f32.partialorder %v357, 0.0
      %vm550 = vcmp.ge.f32.partialorder %v358, 0.0
      %vm551 = vcmp.ge.f32.partialorder %v359, 0.0
      %vm552 = vcmp.ge.f32.partialorder %v360, 0.0
      %vm553 = vcmp.ge.f32.partialorder %v361, 0.0
      %vm554 = vcmp.ge.f32.partialorder %v362, 0.0
      %vm555 = vcmp.ge.f32.partialorder %v363, 0.0
      %vm556 = vcmp.ge.f32.partialorder %v364, 0.0
      %vm557 = vcmp.ge.f32.partialorder %v365, 0.0
      %vm558 = vcmp.ge.f32.partialorder %v366, 0.0
      %vm559 = vcmp.ge.f32.partialorder %v367, 0.0
      %vm560 = vcmp.ge.f32.partialorder %v368, 0.0
      %vm561 = vcmp.ge.f32.partialorder %v369, 0.0
      %vm562 = vcmp.ge.f32.partialorder %v370, 0.0
      %vm563 = vcmp.ge.f32.partialorder %v371, 0.0
      %vm564 = vcmp.ge.f32.partialorder %v372, 0.0
      %vm565 = vcmp.ge.f32.partialorder %v373, 0.0
      %vm566 = vcmp.ge.f32.partialorder %v374, 0.0
      %vm567 = vcmp.ge.f32.partialorder %v375, 0.0
      %vm568 = vcmp.ge.f32.partialorder %v376, 0.0
      %v569 = vrcp.pop %v505
      %v570 = vmul.f32 %v505, %v569
      %v571 = vsub.f32 1.0, %v570
      %v572 = vmul.f32 %v569, %v571
      %v573 = vadd.f32 %v569, %v572
      %vm574 = vweird.f32 %v505
      %vm575 = vweird.f32 %v569
      %vm576 = vmor %vm574, %vm575
      %v577 = vsel %vm576, %v569, %v573
      %v578 = vand.u32 2147483647, %v505
      %vm579 = vcmp.eq.f32.partialorder %v578, 8.507059e+37
      %v580 = vand.u32 %v505, 2147483648
      %v581 = vor.u32 1.1754944e-38, %v580
      %v582 = vsel %vm579, %v581, %v577
      %v583 = vmul.f32 1.0, %v582
      %v584 = vrcp.pop %v506
      %v585 = vmul.f32 %v506, %v584
      %v586 = vsub.f32 1.0, %v585
      %v587 = vmul.f32 %v584, %v586
      %v588 = vadd.f32 %v584, %v587
      %vm589 = vweird.f32 %v506
      %vm590 = vweird.f32 %v584
      %vm591 = vmor %vm589, %vm590
      %v592 = vsel %vm591, %v584, %v588
      %v593 = vand.u32 2147483647, %v506
      %vm594 = vcmp.eq.f32.partialorder %v593, 8.507059e+37
      %v595 = vand.u32 %v506, 2147483648
      %v596 = vor.u32 1.1754944e-38, %v595
      %v597 = vsel %vm594, %v596, %v592
      %v598 = vmul.f32 1.0, %v597
      %v599 = vrcp.pop %v507
      %v600 = vmul.f32 %v507, %v599
      %v601 = vsub.f32 1.0, %v600
      %v602 = vmul.f32 %v599, %v601
      %v603 = vadd.f32 %v599, %v602
      %vm604 = vweird.f32 %v507
      %vm605 = vweird.f32 %v599
      %vm606 = vmor %vm604, %vm605
      %v607 = vsel %vm606, %v599, %v603
      %v608 = vand.u32 2147483647, %v507
      %vm609 = vcmp.eq.f32.partialorder %v608, 8.507059e+37
      %v610 = vand.u32 %v507, 2147483648
      %v611 = vor.u32 1.1754944e-38, %v610
      %v612 = vsel %vm609, %v611, %v607
      %v613 = vmul.f32 1.0, %v612
      %v614 = vrcp.pop %v508
      %v615 = vmul.f32 %v508, %v614
      %v616 = vsub.f32 1.0, %v615
      %v617 = vmul.f32 %v614, %v616
      %v618 = vadd.f32 %v614, %v617
      %vm619 = vweird.f32 %v508
      %vm620 = vweird.f32 %v614
      %vm621 = vmor %vm619, %vm620
      %v622 = vsel %vm621, %v614, %v618
      %v623 = vand.u32 2147483647, %v508
      %vm624 = vcmp.eq.f32.partialorder %v623, 8.507059e+37
      %v625 = vand.u32 %v508, 2147483648
      %v626 = vor.u32 1.1754944e-38, %v625
      %v627 = vsel %vm624, %v626, %v622
      %v628 = vmul.f32 1.0, %v627
      %v629 = vrcp.pop %v509
      %v630 = vmul.f32 %v509, %v629
      %v631 = vsub.f32 1.0, %v630
      %v632 = vmul.f32 %v629, %v631
      %v633 = vadd.f32 %v629, %v632
      %vm634 = vweird.f32 %v509
      %vm635 = vweird.f32 %v629
      %vm636 = vmor %vm634, %vm635
      %v637 = vsel %vm636, %v629, %v633
      %v638 = vand.u32 2147483647, %v509
      %vm639 = vcmp.eq.f32.partialorder %v638, 8.507059e+37
      %v640 = vand.u32 %v509, 2147483648
      %v641 = vor.u32 1.1754944e-38, %v640
      %v642 = vsel %vm639, %v641, %v637
      %v643 = vmul.f32 1.0, %v642
      %v644 = vrcp.pop %v510
      %v645 = vmul.f32 %v510, %v644
      %v646 = vsub.f32 1.0, %v645
      %v647 = vmul.f32 %v644, %v646
      %v648 = vadd.f32 %v644, %v647
      %vm649 = vweird.f32 %v510
      %vm650 = vweird.f32 %v644
      %vm651 = vmor %vm649, %vm650
      %v652 = vsel %vm651, %v644, %v648
      %v653 = vand.u32 2147483647, %v510
      %vm654 = vcmp.eq.f32.partialorder %v653, 8.507059e+37
      %v655 = vand.u32 %v510, 2147483648
      %v656 = vor.u32 1.1754944e-38, %v655
      %v657 = vsel %vm654, %v656, %v652
      %v658 = vmul.f32 1.0, %v657
      %v659 = vrcp.pop %v511
      %v660 = vmul.f32 %v511, %v659
      %v661 = vsub.f32 1.0, %v660
      %v662 = vmul.f32 %v659, %v661
      %v663 = vadd.f32 %v659, %v662
      %vm664 = vweird.f32 %v511
      %vm665 = vweird.f32 %v659
      %vm666 = vmor %vm664, %vm665
      %v667 = vsel %vm666, %v659, %v663
      %v668 = vand.u32 2147483647, %v511
      %vm669 = vcmp.eq.f32.partialorder %v668, 8.507059e+37
      %v670 = vand.u32 %v511, 2147483648
      %v671 = vor.u32 1.1754944e-38, %v670
      %v672 = vsel %vm669, %v671, %v667
      %v673 = vmul.f32 1.0, %v672
      %v674 = vrcp.pop %v512
      %v675 = vmul.f32 %v512, %v674
      %v676 = vsub.f32 1.0, %v675
      %v677 = vmul.f32 %v674, %v676
      %v678 = vadd.f32 %v674, %v677
      %vm679 = vweird.f32 %v512
      %vm680 = vweird.f32 %v674
      %vm681 = vmor %vm679, %vm680
      %v682 = vsel %vm681, %v674, %v678
      %v683 = vand.u32 2147483647, %v512
      %vm684 = vcmp.eq.f32.partialorder %v683, 8.507059e+37
      %v685 = vand.u32 %v512, 2147483648
      %v686 = vor.u32 1.1754944e-38, %v685
      %v687 = vsel %vm684, %v686, %v682
      %v688 = vmul.f32 1.0, %v687
      %v689 = vrcp.pop %v513
      %v690 = vmul.f32 %v513, %v689
      %v691 = vsub.f32 1.0, %v690
      %v692 = vmul.f32 %v689, %v691
      %v693 = vadd.f32 %v689, %v692
      %vm694 = vweird.f32 %v513
      %vm695 = vweird.f32 %v689
      %vm696 = vmor %vm694, %vm695
      %v697 = vsel %vm696, %v689, %v693
      %v698 = vand.u32 2147483647, %v513
      %vm699 = vcmp.eq.f32.partialorder %v698, 8.507059e+37
      %v700 = vand.u32 %v513, 2147483648
      %v701 = vor.u32 1.1754944e-38, %v700
      %v702 = vsel %vm699, %v701, %v697
      %v703 = vmul.f32 1.0, %v702
      %v704 = vrcp.pop %v514
      %v705 = vmul.f32 %v514, %v704
      %v706 = vsub.f32 1.0, %v705
      %v707 = vmul.f32 %v704, %v706
      %v708 = vadd.f32 %v704, %v707
      %vm709 = vweird.f32 %v514
      %vm710 = vweird.f32 %v704
      %vm711 = vmor %vm709, %vm710
      %v712 = vsel %vm711, %v704, %v708
      %v713 = vand.u32 2147483647, %v514
      %vm714 = vcmp.eq.f32.partialorder %v713, 8.507059e+37
      %v715 = vand.u32 %v514, 2147483648
      %v716 = vor.u32 1.1754944e-38, %v715
      %v717 = vsel %vm714, %v716, %v712
      %v718 = vmul.f32 1.0, %v717
      %v719 = vrcp.pop %v515
      %v720 = vmul.f32 %v515, %v719
      %v721 = vsub.f32 1.0, %v720
      %v722 = vmul.f32 %v719, %v721
      %v723 = vadd.f32 %v719, %v722
      %vm724 = vweird.f32 %v515
      %vm725 = vweird.f32 %v719
      %vm726 = vmor %vm724, %vm725
      %v727 = vsel %vm726, %v719, %v723
      %v728 = vand.u32 2147483647, %v515
      %vm729 = vcmp.eq.f32.partialorder %v728, 8.507059e+37
      %v730 = vand.u32 %v515, 2147483648
      %v731 = vor.u32 1.1754944e-38, %v730
      %v732 = vsel %vm729, %v731, %v727
      %v733 = vmul.f32 1.0, %v732
      %v734 = vrcp.pop %v516
      %v735 = vmul.f32 %v516, %v734
      %v736 = vsub.f32 1.0, %v735
      %v737 = vmul.f32 %v734, %v736
      %v738 = vadd.f32 %v734, %v737
      %vm739 = vweird.f32 %v516
      %vm740 = vweird.f32 %v734
      %vm741 = vmor %vm739, %vm740
      %v742 = vsel %vm741, %v734, %v738
      %v743 = vand.u32 2147483647, %v516
      %vm744 = vcmp.eq.f32.partialorder %v743, 8.507059e+37
      %v745 = vand.u32 %v516, 2147483648
      %v746 = vor.u32 1.1754944e-38, %v745
      %v747 = vsel %vm744, %v746, %v742
      %v748 = vmul.f32 1.0, %v747
      %v749 = vrcp.pop %v517
      %v750 = vmul.f32 %v517, %v749
      %v751 = vsub.f32 1.0, %v750
      %v752 = vmul.f32 %v749, %v751
      %v753 = vadd.f32 %v749, %v752
      %vm754 = vweird.f32 %v517
      %vm755 = vweird.f32 %v749
      %vm756 = vmor %vm754, %vm755
      %v757 = vsel %vm756, %v749, %v753
      %v758 = vand.u32 2147483647, %v517
      %vm759 = vcmp.eq.f32.partialorder %v758, 8.507059e+37
      %v760 = vand.u32 %v517, 2147483648
      %v761 = vor.u32 1.1754944e-38, %v760
      %v762 = vsel %vm759, %v761, %v757
      %v763 = vmul.f32 1.0, %v762
      %v764 = vrcp.pop %v518
      %v765 = vmul.f32 %v518, %v764
      %v766 = vsub.f32 1.0, %v765
      %v767 = vmul.f32 %v764, %v766
      %v768 = vadd.f32 %v764, %v767
      %vm769 = vweird.f32 %v518
      %vm770 = vweird.f32 %v764
      %vm771 = vmor %vm769, %vm770
      %v772 = vsel %vm771, %v764, %v768
      %v773 = vand.u32 2147483647, %v518
      %vm774 = vcmp.eq.f32.partialorder %v773, 8.507059e+37
      %v775 = vand.u32 %v518, 2147483648
      %v776 = vor.u32 1.1754944e-38, %v775
      %v777 = vsel %vm774, %v776, %v772
      %v778 = vmul.f32 1.0, %v777
      %v779 = vrcp.pop %v519
      %v780 = vmul.f32 %v519, %v779
      %v781 = vsub.f32 1.0, %v780
      %v782 = vmul.f32 %v779, %v781
      %v783 = vadd.f32 %v779, %v782
      %vm784 = vweird.f32 %v519
      %vm785 = vweird.f32 %v779
      %vm786 = vmor %vm784, %vm785
      %v787 = vsel %vm786, %v779, %v783
      %v788 = vand.u32 2147483647, %v519
      %vm789 = vcmp.eq.f32.partialorder %v788, 8.507059e+37
      %v790 = vand.u32 %v519, 2147483648
      %v791 = vor.u32 1.1754944e-38, %v790
      %v792 = vsel %vm789, %v791, %v787
      %v793 = vmul.f32 1.0, %v792
      %v794 = vrcp.pop %v520
      %v795 = vmul.f32 %v520, %v794
      %v796 = vsub.f32 1.0, %v795
      %v797 = vmul.f32 %v794, %v796
      %v798 = vadd.f32 %v794, %v797
      %vm799 = vweird.f32 %v520
      %vm800 = vweird.f32 %v794
      %vm801 = vmor %vm799, %vm800
      %v802 = vsel %vm801, %v794, %v798
      %v803 = vand.u32 2147483647, %v520
      %vm804 = vcmp.eq.f32.partialorder %v803, 8.507059e+37
      %v805 = vand.u32 %v520, 2147483648
      %v806 = vor.u32 1.1754944e-38, %v805
      %v807 = vsel %vm804, %v806, %v802
      %v808 = vmul.f32 1.0, %v807
      %v809 = vrcp.pop %v521
      %v810 = vmul.f32 %v521, %v809
      %v811 = vsub.f32 1.0, %v810
      %v812 = vmul.f32 %v809, %v811
      %v813 = vadd.f32 %v809, %v812
      %vm814 = vweird.f32 %v521
      %vm815 = vweird.f32 %v809
      %vm816 = vmor %vm814, %vm815
      %v817 = vsel %vm816, %v809, %v813
      %v818 = vand.u32 2147483647, %v521
      %vm819 = vcmp.eq.f32.partialorder %v818, 8.507059e+37
      %v820 = vand.u32 %v521, 2147483648
      %v821 = vor.u32 1.1754944e-38, %v820
      %v822 = vsel %vm819, %v821, %v817
      %v823 = vmul.f32 1.0, %v822
      %v824 = vrcp.pop %v522
      %v825 = vmul.f32 %v522, %v824
      %v826 = vsub.f32 1.0, %v825
      %v827 = vmul.f32 %v824, %v826
      %v828 = vadd.f32 %v824, %v827
      %vm829 = vweird.f32 %v522
      %vm830 = vweird.f32 %v824
      %vm831 = vmor %vm829, %vm830
      %v832 = vsel %vm831, %v824, %v828
      %v833 = vand.u32 2147483647, %v522
      %vm834 = vcmp.eq.f32.partialorder %v833, 8.507059e+37
      %v835 = vand.u32 %v522, 2147483648
      %v836 = vor.u32 1.1754944e-38, %v835
      %v837 = vsel %vm834, %v836, %v832
      %v838 = vmul.f32 1.0, %v837
      %v839 = vrcp.pop %v523
      %v840 = vmul.f32 %v523, %v839
      %v841 = vsub.f32 1.0, %v840
      %v842 = vmul.f32 %v839, %v841
      %v843 = vadd.f32 %v839, %v842
      %vm844 = vweird.f32 %v523
      %vm845 = vweird.f32 %v839
      %vm846 = vmor %vm844, %vm845
      %v847 = vsel %vm846, %v839, %v843
      %v848 = vand.u32 2147483647, %v523
      %vm849 = vcmp.eq.f32.partialorder %v848, 8.507059e+37
      %v850 = vand.u32 %v523, 2147483648
      %v851 = vor.u32 1.1754944e-38, %v850
      %v852 = vsel %vm849, %v851, %v847
      %v853 = vmul.f32 1.0, %v852
      %v854 = vrcp.pop %v524
      %v855 = vmul.f32 %v524, %v854
      %v856 = vsub.f32 1.0, %v855
      %v857 = vmul.f32 %v854, %v856
      %v858 = vadd.f32 %v854, %v857
      %vm859 = vweird.f32 %v524
      %vm860 = vweird.f32 %v854
      %vm861 = vmor %vm859, %vm860
      %v862 = vsel %vm861, %v854, %v858
      %v863 = vand.u32 2147483647, %v524
      %vm864 = vcmp.eq.f32.partialorder %v863, 8.507059e+37
      %v865 = vand.u32 %v524, 2147483648
      %v866 = vor.u32 1.1754944e-38, %v865
      %v867 = vsel %vm864, %v866, %v862
      %v868 = vmul.f32 1.0, %v867
      %v869 = vrcp.pop %v525
      %v870 = vmul.f32 %v525, %v869
      %v871 = vsub.f32 1.0, %v870
      %v872 = vmul.f32 %v869, %v871
      %v873 = vadd.f32 %v869, %v872
      %vm874 = vweird.f32 %v525
      %vm875 = vweird.f32 %v869
      %vm876 = vmor %vm874, %vm875
      %v877 = vsel %vm876, %v869, %v873
      %v878 = vand.u32 2147483647, %v525
      %vm879 = vcmp.eq.f32.partialorder %v878, 8.507059e+37
      %v880 = vand.u32 %v525, 2147483648
      %v881 = vor.u32 1.1754944e-38, %v880
      %v882 = vsel %vm879, %v881, %v877
      %v883 = vmul.f32 1.0, %v882
      %v884 = vrcp.pop %v526
      %v885 = vmul.f32 %v526, %v884
      %v886 = vsub.f32 1.0, %v885
      %v887 = vmul.f32 %v884, %v886
      %v888 = vadd.f32 %v884, %v887
      %vm889 = vweird.f32 %v526
      %vm890 = vweird.f32 %v884
      %vm891 = vmor %vm889, %vm890
      %v892 = vsel %vm891, %v884, %v888
      %v893 = vand.u32 2147483647, %v526
      %vm894 = vcmp.eq.f32.partialorder %v893, 8.507059e+37
      %v895 = vand.u32 %v526, 2147483648
      %v896 = vor.u32 1.1754944e-38, %v895
      %v897 = vsel %vm894, %v896, %v892
      %v898 = vmul.f32 1.0, %v897
      %v899 = vrcp.pop %v527
      %v900 = vmul.f32 %v527, %v899
      %v901 = vsub.f32 1.0, %v900
      %v902 = vmul.f32 %v899, %v901
      %v903 = vadd.f32 %v899, %v902
      %vm904 = vweird.f32 %v527
      %vm905 = vweird.f32 %v899
      %vm906 = vmor %vm904, %vm905
      %v907 = vsel %vm906, %v899, %v903
      %v908 = vand.u32 2147483647, %v527
      %vm909 = vcmp.eq.f32.partialorder %v908, 8.507059e+37
      %v910 = vand.u32 %v527, 2147483648
      %v911 = vor.u32 1.1754944e-38, %v910
      %v912 = vsel %vm909, %v911, %v907
      %v913 = vmul.f32 1.0, %v912
      %v914 = vrcp.pop %v528
      %v915 = vmul.f32 %v528, %v914
      %v916 = vsub.f32 1.0, %v915
      %v917 = vmul.f32 %v914, %v916
      %v918 = vadd.f32 %v914, %v917
      %vm919 = vweird.f32 %v528
      %vm920 = vweird.f32 %v914
      %vm921 = vmor %vm919, %vm920
      %v922 = vsel %vm921, %v914, %v918
      %v923 = vand.u32 2147483647, %v528
      %vm924 = vcmp.eq.f32.partialorder %v923, 8.507059e+37
      %v925 = vand.u32 %v528, 2147483648
      %v926 = vor.u32 1.1754944e-38, %v925
      %v927 = vsel %vm924, %v926, %v922
      %v928 = vmul.f32 1.0, %v927
      %v929 = vrcp.pop %v529
      %v930 = vmul.f32 %v529, %v929
      %v931 = vsub.f32 1.0, %v930
      %v932 = vmul.f32 %v929, %v931
      %v933 = vadd.f32 %v929, %v932
      %vm934 = vweird.f32 %v529
      %vm935 = vweird.f32 %v929
      %vm936 = vmor %vm934, %vm935
      %v937 = vsel %vm936, %v929, %v933
      %v938 = vand.u32 2147483647, %v529
      %vm939 = vcmp.eq.f32.partialorder %v938, 8.507059e+37
      %v940 = vand.u32 %v529, 2147483648
      %v941 = vor.u32 1.1754944e-38, %v940
      %v942 = vsel %vm939, %v941, %v937
      %v943 = vmul.f32 1.0, %v942
      %v944 = vrcp.pop %v530
      %v945 = vmul.f32 %v530, %v944
      %v946 = vsub.f32 1.0, %v945
      %v947 = vmul.f32 %v944, %v946
      %v948 = vadd.f32 %v944, %v947
      %vm949 = vweird.f32 %v530
      %vm950 = vweird.f32 %v944
      %vm951 = vmor %vm949, %vm950
      %v952 = vsel %vm951, %v944, %v948
      %v953 = vand.u32 2147483647, %v530
      %vm954 = vcmp.eq.f32.partialorder %v953, 8.507059e+37
      %v955 = vand.u32 %v530, 2147483648
      %v956 = vor.u32 1.1754944e-38, %v955
      %v957 = vsel %vm954, %v956, %v952
      %v958 = vmul.f32 1.0, %v957
      %v959 = vrcp.pop %v531
      %v960 = vmul.f32 %v531, %v959
      %v961 = vsub.f32 1.0, %v960
      %v962 = vmul.f32 %v959, %v961
      %v963 = vadd.f32 %v959, %v962
      %vm964 = vweird.f32 %v531
      %vm965 = vweird.f32 %v959
      %vm966 = vmor %vm964, %vm965
      %v967 = vsel %vm966, %v959, %v963
      %v968 = vand.u32 2147483647, %v531
      %vm969 = vcmp.eq.f32.partialorder %v968, 8.507059e+37
      %v970 = vand.u32 %v531, 2147483648
      %v971 = vor.u32 1.1754944e-38, %v970
      %v972 = vsel %vm969, %v971, %v967
      %v973 = vmul.f32 1.0, %v972
      %v974 = vrcp.pop %v532
      %v975 = vmul.f32 %v532, %v974
      %v976 = vsub.f32 1.0, %v975
      %v977 = vmul.f32 %v974, %v976
      %v978 = vadd.f32 %v974, %v977
      %vm979 = vweird.f32 %v532
      %vm980 = vweird.f32 %v974
      %vm981 = vmor %vm979, %vm980
      %v982 = vsel %vm981, %v974, %v978
      %v983 = vand.u32 2147483647, %v532
      %vm984 = vcmp.eq.f32.partialorder %v983, 8.507059e+37
      %v985 = vand.u32 %v532, 2147483648
      %v986 = vor.u32 1.1754944e-38, %v985
      %v987 = vsel %vm984, %v986, %v982
      %v988 = vmul.f32 1.0, %v987
      %v989 = vrcp.pop %v533
      %v990 = vmul.f32 %v533, %v989
      %v991 = vsub.f32 1.0, %v990
      %v992 = vmul.f32 %v989, %v991
      %v993 = vadd.f32 %v989, %v992
      %vm994 = vweird.f32 %v533
      %vm995 = vweird.f32 %v989
      %vm996 = vmor %vm994, %vm995
      %v997 = vsel %vm996, %v989, %v993
      %v998 = vand.u32 2147483647, %v533
      %vm999 = vcmp.eq.f32.partialorder %v998, 8.507059e+37
      %v1000 = vand.u32 %v533, 2147483648
      %v1001 = vor.u32 1.1754944e-38, %v1000
      %v1002 = vsel %vm999, %v1001, %v997
      %v1003 = vmul.f32 1.0, %v1002
      %v1004 = vrcp.pop %v534
      %v1005 = vmul.f32 %v534, %v1004
      %v1006 = vsub.f32 1.0, %v1005
      %v1007 = vmul.f32 %v1004, %v1006
      %v1008 = vadd.f32 %v1004, %v1007
      %vm1009 = vweird.f32 %v534
      %vm1010 = vweird.f32 %v1004
      %vm1011 = vmor %vm1009, %vm1010
      %v1012 = vsel %vm1011, %v1004, %v1008
      %v1013 = vand.u32 2147483647, %v534
      %vm1014 = vcmp.eq.f32.partialorder %v1013, 8.507059e+37
      %v1015 = vand.u32 %v534, 2147483648
      %v1016 = vor.u32 1.1754944e-38, %v1015
      %v1017 = vsel %vm1014, %v1016, %v1012
      %v1018 = vmul.f32 1.0, %v1017
      %v1019 = vrcp.pop %v535
      %v1020 = vmul.f32 %v535, %v1019
      %v1021 = vsub.f32 1.0, %v1020
      %v1022 = vmul.f32 %v1019, %v1021
      %v1023 = vadd.f32 %v1019, %v1022
      %vm1024 = vweird.f32 %v535
      %vm1025 = vweird.f32 %v1019
      %vm1026 = vmor %vm1024, %vm1025
      %v1027 = vsel %vm1026, %v1019, %v1023
      %v1028 = vand.u32 2147483647, %v535
      %vm1029 = vcmp.eq.f32.partialorder %v1028, 8.507059e+37
      %v1030 = vand.u32 %v535, 2147483648
      %v1031 = vor.u32 1.1754944e-38, %v1030
      %v1032 = vsel %vm1029, %v1031, %v1027
      %v1033 = vmul.f32 1.0, %v1032
      %v1034 = vrcp.pop %v536
      %v1035 = vmul.f32 %v536, %v1034
      %v1036 = vsub.f32 1.0, %v1035
      %v1037 = vmul.f32 %v1034, %v1036
      %v1038 = vadd.f32 %v1034, %v1037
      %vm1039 = vweird.f32 %v536
      %vm1040 = vweird.f32 %v1034
      %vm1041 = vmor %vm1039, %vm1040
      %v1042 = vsel %vm1041, %v1034, %v1038
      %v1043 = vand.u32 2147483647, %v536
      %vm1044 = vcmp.eq.f32.partialorder %v1043, 8.507059e+37
      %v1045 = vand.u32 %v536, 2147483648
      %v1046 = vor.u32 1.1754944e-38, %v1045
      %v1047 = vsel %vm1044, %v1046, %v1042
      %v1048 = vmul.f32 1.0, %v1047
      %v1049 = vmul.f32 %v442, %v582
      %v1050 = vmul.f32 %v444, %v597
      %v1051 = vmul.f32 %v446, %v612
      %v1052 = vmul.f32 %v448, %v627
      %v1053 = vmul.f32 %v450, %v642
      %v1054 = vmul.f32 %v452, %v657
      %v1055 = vmul.f32 %v454, %v672
      %v1056 = vmul.f32 %v456, %v687
      %v1057 = vmul.f32 %v458, %v702
      %v1058 = vmul.f32 %v460, %v717
      %v1059 = vmul.f32 %v462, %v732
      %v1060 = vmul.f32 %v464, %v747
      %v1061 = vmul.f32 %v466, %v762
      %v1062 = vmul.f32 %v468, %v777
      %v1063 = vmul.f32 %v470, %v792
      %v1064 = vmul.f32 %v472, %v807
      %v1065 = vmul.f32 %v474, %v822
      %v1066 = vmul.f32 %v476, %v837
      %v1067 = vmul.f32 %v478, %v852
      %v1068 = vmul.f32 %v480, %v867
      %v1069 = vmul.f32 %v482, %v882
      %v1070 = vmul.f32 %v484, %v897
      %v1071 = vmul.f32 %v486, %v912
      %v1072 = vmul.f32 %v488, %v927
      %v1073 = vmul.f32 %v490, %v942
      %v1074 = vmul.f32 %v492, %v957
      %v1075 = vmul.f32 %v494, %v972
      %v1076 = vmul.f32 %v496, %v987
      %v1077 = vmul.f32 %v498, %v1002
      %v1078 = vmul.f32 %v500, %v1017
      %v1079 = vmul.f32 %v502, %v1032
      %v1080 = vmul.f32 %v504, %v1047
      %v1081 = vsel %vm537, %v583, %v1049
      %v1082 = vsel %vm538, %v598, %v1050
      %v1083 = vsel %vm539, %v613, %v1051
      %v1084 = vsel %vm540, %v628, %v1052
      %v1085 = vsel %vm541, %v643, %v1053
      %v1086 = vsel %vm542, %v658, %v1054
      %v1087 = vsel %vm543, %v673, %v1055
      %v1088 = vsel %vm544, %v688, %v1056
      %v1089 = vsel %vm545, %v703, %v1057
      %v1090 = vsel %vm546, %v718, %v1058
      %v1091 = vsel %vm547, %v733, %v1059
      %v1092 = vsel %vm548, %v748, %v1060
      %v1093 = vsel %vm549, %v763, %v1061
      %v1094 = vsel %vm550, %v778, %v1062
      %v1095 = vsel %vm551, %v793, %v1063
      %v1096 = vsel %vm552, %v808, %v1064
      %v1097 = vsel %vm553, %v823, %v1065
      %v1098 = vsel %vm554, %v838, %v1066
      %v1099 = vsel %vm555, %v853, %v1067
      %v1100 = vsel %vm556, %v868, %v1068
      %v1101 = vsel %vm557, %v883, %v1069
      %v1102 = vsel %vm558, %v898, %v1070
      %v1103 = vsel %vm559, %v913, %v1071
      %v1104 = vsel %vm560, %v928, %v1072
      %v1105 = vsel %vm561, %v943, %v1073
      %v1106 = vsel %vm562, %v958, %v1074
      %v1107 = vsel %vm563, %v973, %v1075
      %v1108 = vsel %vm564, %v988, %v1076
      %v1109 = vsel %vm565, %v1003, %v1077
      %v1110 = vsel %vm566, %v1018, %v1078
      %v1111 = vsel %vm567, %v1033, %v1079
      %v1112 = vsel %vm568, %v1048, %v1080
      %vm1113 = vcmask 7168
      %1114 = vst.msk [vmem:[%s174] sm:$0xff] %vm1113, %v1081
      %1115 = vst.msk [vmem:[%s174 + $0x8] sm:$0xff] %vm1113, %v1082
      %1116 = vst.msk [vmem:[%s174 + $0x10] sm:$0xff] %vm1113, %v1083
      %1117 = vst.msk [vmem:[%s174 + $0x18] sm:$0xff] %vm1113, %v1084
      %1118 = vst.msk [vmem:[%s174 + $0x20] sm:$0xff] %vm1113, %v1085
      %1119 = vst.msk [vmem:[%s174 + $0x28] sm:$0xff] %vm1113, %v1086
      %1120 = vst.msk [vmem:[%s174 + $0x30] sm:$0xff] %vm1113, %v1087
      %1121 = vst.msk [vmem:[%s174 + $0x38] sm:$0xff] %vm1113, %v1088
      %1122 = vst.msk [vmem:[%s174 + $0x40] sm:$0xff] %vm1113, %v1089
      %1123 = vst.msk [vmem:[%s174 + $0x48] sm:$0xff] %vm1113, %v1090
      %1124 = vst.msk [vmem:[%s174 + $0x50] sm:$0xff] %vm1113, %v1091
      %1125 = vst.msk [vmem:[%s174 + $0x58] sm:$0xff] %vm1113, %v1092
      %1126 = vst.msk [vmem:[%s174 + $0x60] sm:$0xff] %vm1113, %v1093
      %1127 = vst.msk [vmem:[%s174 + $0x68] sm:$0xff] %vm1113, %v1094
      %1128 = vst.msk [vmem:[%s174 + $0x70] sm:$0xff] %vm1113, %v1095
      %1129 = vst.msk [vmem:[%s174 + $0x78] sm:$0xff] %vm1113, %v1096
      %1130 = vst.msk [vmem:[%s174 + $0x80] sm:$0xff] %vm1113, %v1097
      %1131 = vst.msk [vmem:[%s174 + $0x88] sm:$0xff] %vm1113, %v1098
      %1132 = vst.msk [vmem:[%s174 + $0x90] sm:$0xff] %vm1113, %v1099
      %1133 = vst.msk [vmem:[%s174 + $0x98] sm:$0xff] %vm1113, %v1100
      %1134 = vst.msk [vmem:[%s174 + $0xa0] sm:$0xff] %vm1113, %v1101
      %1135 = vst.msk [vmem:[%s174 + $0xa8] sm:$0xff] %vm1113, %v1102
      %1136 = vst.msk [vmem:[%s174 + $0xb0] sm:$0xff] %vm1113, %v1103
      %1137 = vst.msk [vmem:[%s174 + $0xb8] sm:$0xff] %vm1113, %v1104
      %1138 = vst.msk [vmem:[%s174 + $0xc0] sm:$0xff] %vm1113, %v1105
      %1139 = vst.msk [vmem:[%s174 + $0xc8] sm:$0xff] %vm1113, %v1106
      %1140 = vst.msk [vmem:[%s174 + $0xd0] sm:$0xff] %vm1113, %v1107
      %1141 = vst.msk [vmem:[%s174 + $0xd8] sm:$0xff] %vm1113, %v1108
      %1142 = vst.msk [vmem:[%s174 + $0xe0] sm:$0xff] %vm1113, %v1109
      %1143 = vst.msk [vmem:[%s174 + $0xe8] sm:$0xff] %vm1113, %v1110
      %1144 = vst.msk [vmem:[%s174 + $0xf0] sm:$0xff] %vm1113, %v1111
      %1145 = vst.msk [vmem:[%s174 + $0xf8] sm:$0xff] %vm1113, %v1112
      %s1146 = smul.u32 32, %s16
      %p1147 = scmp.lt.s32.totalorder %s1146, 63
      %s1148 = scalar_select %p1147, %s1146, 63
      %s1149 = smul.addr %s1148, 8
      %s1150 = scalar_lea.vmem %s3, %s1149
      // Predicated region
      $region33: #{tpu_custom_call.1} parent=31 // pred_check
        %p1151 = pneg %p102
      $region34: #{tpu_custom_call.1} parent=31 // pred_check_branch
        %1153 = sbr.rel (%p1151) target = $region36
      $region35: #{tpu_custom_call.1} parent=31 // pred_region
        %s1154 = smul.u32 32, %s16
      $region36: #{tpu_custom_call.1} parent=31 // pred_fallthru
        _
    $region32: #{tpu_custom_call.1} parent=5 // pred_fallthru
      _
    %p1155 = scmp.le.s32.totalorder 2, %s11
    // Predicated region
    $region37: #{tpu_custom_call.1} parent=5 // pred_check
      %p1156 = pneg %p1155
    $region38: #{tpu_custom_call.1} parent=5 // pred_check_branch
      %1158 = sbr.rel (%p1156) target = $region40
    $region39: #{tpu_custom_call.1} parent=5 // pred_region
      %s1159 = ssub.s32 %s11, 2
      // Predicated region
      $region41: #{tpu_custom_call.1} parent=39 // pred_check
        %p1160 = pneg %p108
      $region42: #{tpu_custom_call.1} parent=39 // pred_check_branch
        %1162 = sbr.rel (%p1160) target = $region44
      $region43: #{tpu_custom_call.1} parent=39 // pred_region
        %s1163 = smul.u32 32, %s17
        %p1164 = scmp.lt.s32.totalorder %s1163, 63
        %s1165 = scalar_select %p1164, %s1163, 63
        %s1166 = smul.addr %s1165, 8
        %s1167 = scalar_lea.vmem %s3, %s1166
      $region44: #{tpu_custom_call.1} parent=39 // pred_fallthru
        _
    $region40: #{tpu_custom_call.1} parent=5 // pred_fallthru
      _
  $region6: #{tpu_custom_call.1} parent=0 // loop_footer
    %s15 = sadd.s32 1, %s11
  $region7: #{tpu_custom_call.1} parent=0 // loop_footer_branch
    %10 = sbr.rel target = $region3
  $region8: #{tpu_custom_call.1} parent=0 // loop_exit
    _

</llo_original>
